<compile_context>
chip_gen: v6e
topology: v6e:2x2x1
jax: 0.10.0
libtpu: 0.0.40
codegen_flags: <defaults>
</compile_context>

<pallas_src>
import functools

import numpy as np
import jax
import jax.numpy as jnp
from jax.experimental import pallas as pl
from jax.experimental.pallas import tpu as pltpu


def _gaussian_taps(sigma):
    """Exactly mirrors Smoothing.define_kernel (host-side numpy)."""
    mil = sigma * 2 * 5 * 1 // 2
    filt = np.arange(sigma * 2 * 5 + 1) - mil
    x = np.exp(-1 / 2 * filt ** 2 / (2 * sigma ** 2))
    return (x / np.sum(x)).astype(np.float32)


def _smoothing_kernel(q_ref, o_ref, *, taps, margin, k):
    """One lane tile: out[i, :] = sum_j taps[j] * q[margin + i + j, :]."""
    acc = taps[0] * q_ref[pl.ds(margin, k), :]
    for j in range(1, len(taps)):                     # static, fully unrolled
        acc = acc + taps[j] * q_ref[pl.ds(margin + j, k), :]
    o_ref[...] = acc


def smoothing(contours, sigma):
    """JAX/Pallas equivalent of Smoothing(sigma).forward(contours)."""
    b, n, k, two = contours.shape
    assert two == 2
    taps = _gaussian_taps(sigma)
    L = int(taps.shape[0])
    left = (L - 1) // 2                 # torch conv1d(padding='same') left pad
    right = (L - 1) - left              # (exact for odd L; Gaussian taps are odd
    margin = k // 2                     #  for integer sigma)

    bn = b * n
    c = contours.reshape(bn, k, 2).astype(jnp.float32)
    # circular padding, exactly like torch.cat([bot, contours, top], dim=1)
    p = jnp.concatenate([c[:, k - margin:], c, c[:, :margin]], axis=1)
    # fold conv1d('same') zero padding into the same buffer
    q = jnp.pad(p, ((0, 0), (left, right), (0, 0)))
    kpad = k + 2 * margin + L - 1                      # q.shape[1]

    # (bn, kpad, 2) -> (kpad, bn*2): node axis on sublanes, channels on lanes
    q = jnp.transpose(q, (1, 0, 2)).reshape(kpad, bn * 2)

    # lane-dense tiling of the channel axis (grow tile to amortize step overhead)
    chans = bn * 2
    tile = 128
    while tile < 2048 and chans > 4 * tile:
        tile *= 2
    cpad = pl.cdiv(chans, tile) * tile
    q = jnp.pad(q, ((0, 0), (0, cpad - chans)))

    kernel = functools.partial(
        _smoothing_kernel,
        taps=tuple(float(t) for t in taps),
        margin=margin,
        k=k,
    )
    out = pl.pallas_call(
        kernel,
        out_shape=jax.ShapeDtypeStruct((k, cpad), jnp.float32),
        grid=(cpad // tile,),
        in_specs=[pl.BlockSpec((kpad, tile), lambda i: (0, i))],
        out_specs=pl.BlockSpec((k, tile), lambda i: (0, i)),
        compiler_params=pltpu.CompilerParams(
            dimension_semantics=("parallel",)),
    )(q)

    out = out[:, :chans].reshape(k, bn, 2)
    return jnp.transpose(out, (1, 0, 2)).reshape(b, n, k, 2)


def _reference(contours, sigma):
    """Independent pure-JAX reference mirroring the torch forward pass."""
    taps = jnp.asarray(_gaussian_taps(sigma))
    b, n, k, _ = contours.shape
    margin = k // 2
    c = contours.reshape(b * n, k, 2).astype(jnp.float32)
    p = jnp.concatenate([c[:, k - margin:], c, c[:, :margin]], axis=1)
    x = jnp.moveaxis(p, -1, 1)                          # (bn, 2, k + 2*margin)
    rhs = jnp.broadcast_to(taps[None, None, :], (2, 1, taps.shape[0]))
    y = jax.lax.conv_general_dilated(
        x, rhs, window_strides=(1,), padding="SAME",
        feature_group_count=2, precision=jax.lax.Precision.HIGHEST)
    y = jnp.moveaxis(y, 1, -1)[:, margin:-margin, :]
    return y.reshape(b, n, k, 2)


if __name__ == "__main__":
    B, N, K, SIGMA = 2, 4, 16, 1.0
    key = jax.random.PRNGKey(0)
    contours = jax.random.uniform(key, (B, N, K, 2), dtype=jnp.float32)

    out = smoothing(contours, SIGMA)
    out = jax.block_until_ready(out)
    assert out.shape == (B, N, K, 2), out.shape
    assert bool(jnp.all(jnp.isfinite(out)))

    ref = _reference(contours, SIGMA)
    max_err = float(jnp.max(jnp.abs(out - ref)))
    assert bool(jnp.allclose(out, ref, rtol=1e-4, atol=1e-4)), max_err
    print("KERNEL_OK")
</pallas_src>

<mosaic_0001>
module attributes {stable_mosaic.version = 11 : i64} {
  func.func @_smoothing_kernel(%arg0: i32, %arg1: memref<42x128xf32, #tpu.memory_space<vmem>>, %arg2: memref<16x128xf32, #tpu.memory_space<vmem>>) attributes {dimension_semantics = [#tpu.dimension_semantics<parallel>], iteration_bounds = array<i64: 1>, scalar_prefetch = 0 : i64, scratch_operands = 0 : i64, tpu.core_type = #tpu.core_type<tc>, window_params = [{transform_indices = @transform_0, window_bounds = array<i64: 42, 128>}, {transform_indices = @transform_1, window_bounds = array<i64: 16, 128>}]} {
    %c8 = arith.constant 8 : index
    %c0 = arith.constant 0 : index
    %0 = vector.load %arg1[%c8, %c0] : memref<42x128xf32, #tpu.memory_space<vmem>>, vector<16x128xf32>
    %cst = arith.constant 5.44610491E-4 : f32
    %1 = vector.broadcast %cst : f32 to vector<16x128xf32>
    %2 = arith.mulf %1, %0 : vector<16x128xf32>
    %c9 = arith.constant 9 : index
    %c0_0 = arith.constant 0 : index
    %3 = vector.load %arg1[%c9, %c0_0] : memref<42x128xf32, #tpu.memory_space<vmem>>, vector<16x128xf32>
    %cst_1 = arith.constant 0.0051671206 : f32
    %4 = vector.broadcast %cst_1 : f32 to vector<16x128xf32>
    %5 = arith.mulf %4, %3 : vector<16x128xf32>
    %6 = arith.addf %2, %5 : vector<16x128xf32>
    %c10 = arith.constant 10 : index
    %c0_2 = arith.constant 0 : index
    %7 = vector.load %arg1[%c10, %c0_2] : memref<42x128xf32, #tpu.memory_space<vmem>>, vector<16x128xf32>
    %cst_3 = arith.constant 0.0297347251 : f32
    %8 = vector.broadcast %cst_3 : f32 to vector<16x128xf32>
    %9 = arith.mulf %8, %7 : vector<16x128xf32>
    %10 = arith.addf %6, %9 : vector<16x128xf32>
    %c11 = arith.constant 11 : index
    %c0_4 = arith.constant 0 : index
    %11 = vector.load %arg1[%c11, %c0_4] : memref<42x128xf32, #tpu.memory_space<vmem>>, vector<16x128xf32>
    %cst_5 = arith.constant 0.10378439 : f32
    %12 = vector.broadcast %cst_5 : f32 to vector<16x128xf32>
    %13 = arith.mulf %12, %11 : vector<16x128xf32>
    %14 = arith.addf %10, %13 : vector<16x128xf32>
    %c12 = arith.constant 12 : index
    %c0_6 = arith.constant 0 : index
    %15 = vector.load %arg1[%c12, %c0_6] : memref<42x128xf32, #tpu.memory_space<vmem>>, vector<16x128xf32>
    %cst_7 = arith.constant 0.219711557 : f32
    %16 = vector.broadcast %cst_7 : f32 to vector<16x128xf32>
    %17 = arith.mulf %16, %15 : vector<16x128xf32>
    %18 = arith.addf %14, %17 : vector<16x128xf32>
    %c13 = arith.constant 13 : index
    %c0_8 = arith.constant 0 : index
    %19 = vector.load %arg1[%c13, %c0_8] : memref<42x128xf32, #tpu.memory_space<vmem>>, vector<16x128xf32>
    %cst_9 = arith.constant 0.282115221 : f32
    %20 = vector.broadcast %cst_9 : f32 to vector<16x128xf32>
    %21 = arith.mulf %20, %19 : vector<16x128xf32>
    %22 = arith.addf %18, %21 : vector<16x128xf32>
    %c14 = arith.constant 14 : index
    %c0_10 = arith.constant 0 : index
    %23 = vector.load %arg1[%c14, %c0_10] : memref<42x128xf32, #tpu.memory_space<vmem>>, vector<16x128xf32>
    %cst_11 = arith.constant 0.219711557 : f32
    %24 = vector.broadcast %cst_11 : f32 to vector<16x128xf32>
    %25 = arith.mulf %24, %23 : vector<16x128xf32>
    %26 = arith.addf %22, %25 : vector<16x128xf32>
    %c15 = arith.constant 15 : index
    %c0_12 = arith.constant 0 : index
    %27 = vector.load %arg1[%c15, %c0_12] : memref<42x128xf32, #tpu.memory_space<vmem>>, vector<16x128xf32>
    %cst_13 = arith.constant 0.10378439 : f32
    %28 = vector.broadcast %cst_13 : f32 to vector<16x128xf32>
    %29 = arith.mulf %28, %27 : vector<16x128xf32>
    %30 = arith.addf %26, %29 : vector<16x128xf32>
    %c16 = arith.constant 16 : index
    %c0_14 = arith.constant 0 : index
    %31 = vector.load %arg1[%c16, %c0_14] : memref<42x128xf32, #tpu.memory_space<vmem>>, vector<16x128xf32>
    %cst_15 = arith.constant 0.0297347251 : f32
    %32 = vector.broadcast %cst_15 : f32 to vector<16x128xf32>
    %33 = arith.mulf %32, %31 : vector<16x128xf32>
    %34 = arith.addf %30, %33 : vector<16x128xf32>
    %c17 = arith.constant 17 : index
    %c0_16 = arith.constant 0 : index
    %35 = vector.load %arg1[%c17, %c0_16] : memref<42x128xf32, #tpu.memory_space<vmem>>, vector<16x128xf32>
    %cst_17 = arith.constant 0.0051671206 : f32
    %36 = vector.broadcast %cst_17 : f32 to vector<16x128xf32>
    %37 = arith.mulf %36, %35 : vector<16x128xf32>
    %38 = arith.addf %34, %37 : vector<16x128xf32>
    %c18 = arith.constant 18 : index
    %c0_18 = arith.constant 0 : index
    %39 = vector.load %arg1[%c18, %c0_18] : memref<42x128xf32, #tpu.memory_space<vmem>>, vector<16x128xf32>
    %cst_19 = arith.constant 5.44610491E-4 : f32
    %40 = vector.broadcast %cst_19 : f32 to vector<16x128xf32>
    %41 = arith.mulf %40, %39 : vector<16x128xf32>
    %42 = arith.addf %38, %41 : vector<16x128xf32>
    %c0_20 = arith.constant 0 : index
    %c0_21 = arith.constant 0 : index
    %43 = vector.load %arg2[%c0_20, %c0_21] : memref<16x128xf32, #tpu.memory_space<vmem>>, vector<16x128xf32>
    tpu.vector_store %arg2[%c0_20, %c0_21], %42 {strides = array<i32>} : memref<16x128xf32, #tpu.memory_space<vmem>>, vector<16x128xf32>,
    return
  }
  func.func @transform_0(%arg0: i32) -> (i32, i32) {
    %c0_i32 = arith.constant 0 : i32
    %c0_i32_0 = arith.constant 0 : i32
    return %c0_i32, %arg0 : i32, i32
  }
  func.func @transform_1(%arg0: i32) -> (i32, i32) {
    %c0_i32 = arith.constant 0 : i32
    %c0_i32_0 = arith.constant 0 : i32
    return %c0_i32, %arg0 : i32, i32
  }
}

</mosaic_0001>

<llo_original>
// kernel: tpu_custom_call.1
$region0: #{tpu_custom_call.1}
  #allocation0 [shape = 'u32[]', space=smem, size = 0x4, offset = 0x4, fixed_abs, tag = 'smem constant byte address 0x4 - core index']
  #allocation1 [shape = 'u32[144,128]{1,0:T(1,128)}', space=vmem, size = 0x12000, scoped, tag = 'internal scratch']
  %s0 = inlined_call_operand.hbm [shape: f32[42,128], index: 0, kind: input, shape index: {}]
  %s1 = inlined_call_operand.hbm [shape: f32[16,128], index: 1, kind: output, shape index: {}]
  %s2 = sld [smem:[#allocation0]]
  $region18: #{tpu_custom_call.1} parent=0
    _
  %s4 = ssub.s32 1, %s2
  %s5 = scalar_select 0, %s4, %s2
  $region1: #{tpu_custom_call.1} parent=0
    #allocation2 [shape = 'u8[24576]{0}', space=vmem, size = 0x6000, scoped, tag = 'input window, operand 0, single buffered']
    #allocation3 [shape = 's32[1]{0}', space=sflag, size = 0x4, scoped, tag = 'scoped memory for tpu_custom_call.1']
    #allocation4 [shape = 's32[1]{0}', space=sflag, size = 0x4, scoped, tag = 'scoped memory for tpu_custom_call.1']
    #allocation5 [shape = 'u8[8192]{0}', space=vmem, size = 0x2000, scoped, tag = 'output window, operand 0, single buffered']
    %6 = vsyncpa [#allocation3], 0
    %7 = vsyncpa [#allocation4], 0
    // Predicated region
    $region2: #{tpu_custom_call.1} parent=1 // pred_check
      _
    $region3: #{tpu_custom_call.1} parent=1 // pred_check_branch
      %9 = sbr.rel (0) target = $region5
    $region4: #{tpu_custom_call.1} parent=1 // pred_region
      %s11 = ssub.s32 768, 768
      %12 = vsyncadd [#allocation3], %s11
      %s13 = sshll.u32 [#allocation2], 4
      %s14 = int_to_ptr.vmem [resolvable:$true] %s13
      %19 = dma.hbm_to_vmem [thread:$0]  %s0, 768, %s14, [#allocation3], 128, 128, 8
    $region5: #{tpu_custom_call.1} parent=1 // pred_fallthru
      _
    // Predicated region
    $region6: #{tpu_custom_call.1} parent=1 // pred_check
      _
    $region7: #{tpu_custom_call.1} parent=1 // pred_check_branch
      %21 = sbr.rel (0) target = $region9
    $region8: #{tpu_custom_call.1} parent=1 // pred_region
      %22 = dma.done [#allocation3], 768
    $region9: #{tpu_custom_call.1} parent=1 // pred_fallthru
      _
    %v23 = vld [vmem:[#allocation2 + $0x8] sm:$0xff]
    %v24 = vld [vmem:[#allocation2 + $0x10] sm:$0xff]
    %v25 = vmul.f32 %v23, 0.0005446105
    %v26 = vmul.f32 %v24, 0.0005446105
    %v27 = vld [vmem:[#allocation2 + $0x9] sm:$0xff]
    %v28 = vld [vmem:[#allocation2 + $0x11] sm:$0xff]
    %v29 = vmul.f32 %v27, 0.0051671206
    %v30 = vmul.f32 %v28, 0.0051671206
    %v31 = vadd.f32 %v25, %v29
    %v32 = vadd.f32 %v26, %v30
    %v33 = vld [vmem:[#allocation2 + $0xa] sm:$0xff]
    %v34 = vld [vmem:[#allocation2 + $0x12] sm:$0xff]
    %v35 = vmul.f32 %v33, 0.029734725
    %v36 = vmul.f32 %v34, 0.029734725
    %v37 = vadd.f32 %v31, %v35
    %v38 = vadd.f32 %v32, %v36
    %v39 = vld [vmem:[#allocation2 + $0xb] sm:$0xff]
    %v40 = vld [vmem:[#allocation2 + $0x13] sm:$0xff]
    %v41 = vmul.f32 %v39, 0.10378439
    %v42 = vmul.f32 %v40, 0.10378439
    %v43 = vadd.f32 %v37, %v41
    %v44 = vadd.f32 %v38, %v42
    %v45 = vld [vmem:[#allocation2 + $0xc] sm:$0xff]
    %v46 = vld [vmem:[#allocation2 + $0x14] sm:$0xff]
    %v47 = vmul.f32 %v45, 0.21971156
    %v48 = vmul.f32 %v46, 0.21971156
    %v49 = vadd.f32 %v43, %v47
    %v50 = vadd.f32 %v44, %v48
    %v51 = vld [vmem:[#allocation2 + $0xd] sm:$0xff]
    %v52 = vld [vmem:[#allocation2 + $0x15] sm:$0xff]
    %v53 = vmul.f32 %v51, 0.28211522
    %v54 = vmul.f32 %v52, 0.28211522
    %v55 = vadd.f32 %v49, %v53
    %v56 = vadd.f32 %v50, %v54
    %v57 = vld [vmem:[#allocation2 + $0xe] sm:$0xff]
    %v58 = vld [vmem:[#allocation2 + $0x16] sm:$0xff]
    %v59 = vmul.f32 %v57, 0.21971156
    %v60 = vmul.f32 %v58, 0.21971156
    %v61 = vadd.f32 %v55, %v59
    %v62 = vadd.f32 %v56, %v60
    %v63 = vld [vmem:[#allocation2 + $0xf] sm:$0xff]
    %v64 = vld [vmem:[#allocation2 + $0x17] sm:$0xff]
    %v65 = vmul.f32 %v63, 0.10378439
    %v66 = vmul.f32 %v64, 0.10378439
    %v67 = vadd.f32 %v61, %v65
    %v68 = vadd.f32 %v62, %v66
    %v69 = vld [vmem:[#allocation2 + $0x18] sm:$0xff]
    %v70 = vmul.f32 %v24, 0.029734725
    %v71 = vmul.f32 %v69, 0.029734725
    %v72 = vadd.f32 %v67, %v70
    %v73 = vadd.f32 %v68, %v71
    %v74 = vld [vmem:[#allocation2 + $0x19] sm:$0xff]
    %v75 = vmul.f32 %v74, 0.0051671206
    %v76 = vadd.f32 %v72, %v30
    %v77 = vadd.f32 %v73, %v75
    %v78 = vld [vmem:[#allocation2 + $0x1a] sm:$0xff]
    %v79 = vmul.f32 %v34, 0.0005446105
    %v80 = vmul.f32 %v78, 0.0005446105
    %v81 = vadd.f32 %v76, %v79
    %v82 = vadd.f32 %v77, %v80
    %83 = vst [vmem:[#allocation5] sm:$0xff] %v81
    %84 = vst [vmem:[#allocation5 + $0x8] sm:$0xff] %v82
    // Predicated region
    $region10: #{tpu_custom_call.1} parent=1 // pred_check
      _
    $region11: #{tpu_custom_call.1} parent=1 // pred_check_branch
      %86 = sbr.rel (0) target = $region13
    $region12: #{tpu_custom_call.1} parent=1 // pred_region
      %s88 = ssub.s32 256, 256
      %89 = vsyncadd [#allocation4], %s88
      %s90 = sshll.u32 [#allocation5], 4
      %s91 = int_to_ptr.vmem [resolvable:$true] %s90
      %96 = dma.vmem_to_hbm [thread:$0]  %s91, 256, %s1, [#allocation4], 128, 128, 8
    $region13: #{tpu_custom_call.1} parent=1 // pred_fallthru
      _
    // Predicated region
    $region14: #{tpu_custom_call.1} parent=1 // pred_check
      _
    $region15: #{tpu_custom_call.1} parent=1 // pred_check_branch
      %98 = sbr.rel (0) target = $region17
    $region16: #{tpu_custom_call.1} parent=1 // pred_region
      %99 = dma.done [#allocation4], 256
    $region17: #{tpu_custom_call.1} parent=1 // pred_fallthru
      _
    %100 = vsyncpa [#allocation3], 1
    %101 = vsyncpa [#allocation4], 1

</llo_original>
